<compile_context>
chip_gen: v7x
topology: tpu7x:2x2x1
jax: 0.10.0
libtpu: 0.0.40
codegen_flags: <defaults>
</compile_context>

<pallas_src>
import functools

import jax
import jax.numpy as jnp
from jax.experimental import pallas as pl
from jax.experimental.pallas import tpu as pltpu


def _downsample_kernel(x_ref, w_ref, b_ref, o_ref, *, apply_spike, T, compute_dtype):
    # x_ref: (1, K, ts) input-tap tile   (K = C*k*k, ts = spatial tile)
    # w_ref: (E, K)     BN-folded conv weight (compute_dtype)
    # b_ref: (E, 1)     folded bias (f32)
    # o_ref: (1, E, ts) output tile (f32, NCHW-flattened)
    x = x_ref[0]
    if apply_spike:
        # MultiSpike_norm4 (eval): clamp(x, 0, T).round() / T, computed in f32
        # so the round() semantics exactly match the f32 reference.
        x = jnp.round(jnp.clip(x.astype(jnp.float32), 0.0, T)) * (1.0 / T)
    acc = jnp.dot(w_ref[...], x.astype(compute_dtype),
                  preferred_element_type=jnp.float32)        # (E, ts) on the MXU
    o_ref[0] = (acc + b_ref[...]).astype(o_ref.dtype)        # fused conv-bias+BN


def ms_downsampling_forward(x, params, *, kernel_size=3, stride=2, padding=1,
                            first_layer=True, T=4.0, eps=1e-5,
                            spatial_tile=512, compute_dtype=jnp.bfloat16):
    """x: (N, C, H, W) float32.  Returns (N, embed_dims, Ho, Wo) float32."""
    N, C, H, W = x.shape
    w = params["conv_w"]                                     # (E, C, kh, kw) OIHW
    E = w.shape[0]
    k = kernel_size
    K = C * k * k
    Ho = (H + 2 * padding - k) // stride + 1
    Wo = (W + 2 * padding - k) // stride + 1
    S = Ho * Wo

    # ---- fold BatchNorm (eval) + conv bias into weight & a single bias ----
    scale = params["bn_gamma"].astype(jnp.float32) * jax.lax.rsqrt(
        params["bn_var"].astype(jnp.float32) + eps)          # (E,)
    w_folded = w.astype(jnp.float32) * scale[:, None, None, None]
    bias = (params["conv_b"].astype(jnp.float32)
            - params["bn_mean"].astype(jnp.float32)) * scale \
        + params["bn_beta"].astype(jnp.float32)
    # weight laid out (E, K) with K index = (ki*k + kj)*C + c  (matches xcat)
    w_mat = jnp.transpose(w_folded, (0, 2, 3, 1)).reshape(E, K).astype(compute_dtype)
    bias = bias.reshape(E, 1).astype(jnp.float32)

    # ---- per-tap strided slices, channels-first (no im2col, no transposes) ----
    xp = jnp.pad(x, ((0, 0), (0, 0), (padding, padding), (padding, padding)))
    taps = []
    for ki in range(k):
        for kj in range(k):
            sl = xp[:, :, ki:ki + stride * Ho:stride, kj:kj + stride * Wo:stride]
            taps.append(sl.reshape(N, C, S))                 # contiguous reshape
    xcat = jnp.concatenate(taps, axis=1)                     # (N, K, S)

    # ---- spatial (lane) tiling ----
    if S <= spatial_tile:
        ts = S                                               # full extent (OK for BlockSpec)
        S_pad = S
    else:
        ts = max(128, (spatial_tile // 128) * 128)           # lane-dense tiles
        S_pad = pl.cdiv(S, ts) * ts
    if S_pad != S:
        xcat = jnp.pad(xcat, ((0, 0), (0, 0), (0, S_pad - S)))

    kernel = functools.partial(
        _downsample_kernel,
        apply_spike=(not first_layer), T=float(T), compute_dtype=compute_dtype)

    out = pl.pallas_call(
        kernel,
        out_shape=jax.ShapeDtypeStruct((N, E, S_pad), jnp.float32),
        grid_spec=pltpu.PrefetchScalarGridSpec(
            num_scalar_prefetch=0,
            grid=(N, S_pad // ts),
            in_specs=[
                pl.BlockSpec((1, K, ts), lambda n, s: (n, 0, s)),   # input taps tile
                pl.BlockSpec((E, K), lambda n, s: (0, 0)),          # folded weight (resident)
                pl.BlockSpec((E, 1), lambda n, s: (0, 0)),          # folded bias (resident)
            ],
            out_specs=pl.BlockSpec((1, E, ts), lambda n, s: (n, 0, s)),
        ),
        compiler_params=pltpu.CompilerParams(
            dimension_semantics=("parallel", "parallel")),
    )(xcat, w_mat, bias)

    # (N, E, Ho*Wo) -> (N, E, Ho, Wo) is a free contiguous reshape (no transpose).
    out = out[:, :, :S].reshape(N, E, Ho, Wo)
    return out


def _reference_forward(x, params, *, kernel_size, stride, padding,
                       first_layer, T, eps):
    """Pure-JAX f32 reference (lax conv + eval BatchNorm) for verification."""
    del kernel_size
    xin = x
    if not first_layer:
        xin = jnp.round(jnp.clip(xin, 0.0, T)) / T
    y = jax.lax.conv_general_dilated(
        xin, params["conv_w"],
        window_strides=(stride, stride),
        padding=[(padding, padding), (padding, padding)],
        dimension_numbers=("NCHW", "OIHW", "NCHW"))
    y = y + params["conv_b"][None, :, None, None]
    inv = jax.lax.rsqrt(params["bn_var"] + eps)
    y = (y - params["bn_mean"][None, :, None, None]) * inv[None, :, None, None]
    y = y * params["bn_gamma"][None, :, None, None] + params["bn_beta"][None, :, None, None]
    return y


def make_params(key, in_channels, embed_dims, kernel_size):
    ks = jax.random.split(key, 6)
    return {
        "conv_w": 0.1 * jax.random.normal(
            ks[0], (embed_dims, in_channels, kernel_size, kernel_size), jnp.float32),
        "conv_b": 0.05 * jax.random.normal(ks[1], (embed_dims,), jnp.float32),
        "bn_gamma": 1.0 + 0.1 * jax.random.normal(ks[2], (embed_dims,), jnp.float32),
        "bn_beta": 0.1 * jax.random.normal(ks[3], (embed_dims,), jnp.float32),
        "bn_mean": 0.05 * jax.random.normal(ks[4], (embed_dims,), jnp.float32),
        "bn_var": jnp.abs(jax.random.normal(ks[5], (embed_dims,), jnp.float32)) + 0.5,
    }


if __name__ == "__main__":
    key = jax.random.PRNGKey(0)
    k_x, k_p = jax.random.split(key)

    # small shapes consistent with the module
    N, C, H, W = 2, 4, 16, 16
    embed_dims, ksz, stride, padding = 32, 3, 2, 1
    T = 4.0

    x = 2.5 * jax.random.normal(k_x, (N, C, H, W), jnp.float32)
    params = make_params(k_p, C, embed_dims, ksz)

    ok = True
    for first_layer in (True, False):
        ref = _reference_forward(
            x, params, kernel_size=ksz, stride=stride, padding=padding,
            first_layer=first_layer, T=T, eps=1e-5)

        # Exact-math check: f32 MXU operands must match the f32 reference tightly.
        out_f32 = ms_downsampling_forward(
            x, params, kernel_size=ksz, stride=stride, padding=padding,
            first_layer=first_layer, T=T, compute_dtype=jnp.float32)
        out_f32 = jax.block_until_ready(out_f32)
        assert out_f32.shape == (N, embed_dims, H // stride, W // stride)
        ok = ok and bool(jnp.allclose(out_f32, ref, atol=1e-4, rtol=1e-4))

        # Performance default: bf16 MXU operands with f32 accumulation
        # (expected quantization error ~1e-2; loose tolerance vs f32 reference).
        out_bf16 = ms_downsampling_forward(
            x, params, kernel_size=ksz, stride=stride, padding=padding,
            first_layer=first_layer, T=T, compute_dtype=jnp.bfloat16)
        out_bf16 = jax.block_until_ready(out_bf16)
        assert out_bf16.shape == (N, embed_dims, H // stride, W // stride)
        ok = ok and bool(jnp.allclose(out_bf16, ref, atol=1e-1, rtol=1e-1))

    if ok:
        print("KERNEL_OK")
    else:
        print("MISMATCH")
</pallas_src>

<mosaic_0001>
module attributes {stable_mosaic.version = 11 : i64} {
  func.func @_downsample_kernel(%arg0: i32, %arg1: i32, %arg2: memref<1x36x64xf32, #tpu.memory_space<vmem>>, %arg3: memref<32x36xf32, #tpu.memory_space<vmem>>, %arg4: memref<32x1xf32, #tpu.memory_space<vmem>>, %arg5: memref<1x32x64xf32, #tpu.memory_space<vmem>>) attributes {dimension_semantics = [#tpu.dimension_semantics<parallel>, #tpu.dimension_semantics<parallel>], iteration_bounds = array<i64: 2, 1>, scalar_prefetch = 0 : i64, scratch_operands = 0 : i64, tpu.core_type = #tpu.core_type<tc>, window_params = [{transform_indices = @transform_0, window_bounds = array<i64: 1, 36, 64>}, {pipeline_mode = #tpu.pipeline_mode<synchronous>, transform_indices = @transform_1, window_bounds = array<i64: 32, 36>}, {pipeline_mode = #tpu.pipeline_mode<synchronous>, transform_indices = @transform_2, window_bounds = array<i64: 32, 1>}, {transform_indices = @transform_3, window_bounds = array<i64: 1, 32, 64>}]} {
    %c0 = arith.constant 0 : index
    %c0_0 = arith.constant 0 : index
    %c0_1 = arith.constant 0 : index
    %0 = vector.load %arg2[%c0, %c0_0, %c0_1] : memref<1x36x64xf32, #tpu.memory_space<vmem>>, vector<1x36x64xf32>
    %1 = vector.shape_cast %0 : vector<1x36x64xf32> to vector<36x64xf32>
    %c0_2 = arith.constant 0 : index
    %c0_3 = arith.constant 0 : index
    %2 = vector.load %arg3[%c0_2, %c0_3] : memref<32x36xf32, #tpu.memory_space<vmem>>, vector<32x36xf32>
    %cst = arith.constant dense<0.000000e+00> : vector<32x64xf32>
    %3 = tpu.matmul %2, %1, %cst {dimension_numbers = #tpu.dot_dimension_numbers<[1], [0], [0], [1], [0, 0, 1, 1], [], []>} : vector<32x36xf32>, vector<36x64xf32>, vector<32x64xf32> -> vector<32x64xf32>
    %c0_4 = arith.constant 0 : index
    %c0_5 = arith.constant 0 : index
    %4 = vector.load %arg4[%c0_4, %c0_5] : memref<32x1xf32, #tpu.memory_space<vmem>>, vector<32x1xf32>
    %5 = vector.broadcast %4 : vector<32x1xf32> to vector<32x64xf32>
    %6 = arith.addf %3, %5 : vector<32x64xf32>
    %c0_6 = arith.constant 0 : index
    %c0_7 = arith.constant 0 : index
    %c0_8 = arith.constant 0 : index
    %7 = vector.load %arg5[%c0_6, %c0_7, %c0_8] : memref<1x32x64xf32, #tpu.memory_space<vmem>>, vector<1x32x64xf32>
    %8 = vector.shape_cast %7 : vector<1x32x64xf32> to vector<32x64xf32>
    %9 = vector.shape_cast %6 : vector<32x64xf32> to vector<1x32x64xf32>
    tpu.vector_store %arg5[%c0_6, %c0_7, %c0_8], %9 {strides = array<i32>} : memref<1x32x64xf32, #tpu.memory_space<vmem>>, vector<1x32x64xf32>,
    return
  }
  func.func @transform_0(%arg0: i32, %arg1: i32) -> (i32, i32, i32) {
    %c0_i32 = arith.constant 0 : i32
    %c0_i32_0 = arith.constant 0 : i32
    return %arg0, %c0_i32, %arg1 : i32, i32, i32
  }
  func.func @transform_1(%arg0: i32, %arg1: i32) -> (i32, i32) {
    %c0_i32 = arith.constant 0 : i32
    %c0_i32_0 = arith.constant 0 : i32
    %c0_i32_1 = arith.constant 0 : i32
    return %c0_i32, %c0_i32_0 : i32, i32
  }
  func.func @transform_2(%arg0: i32, %arg1: i32) -> (i32, i32) {
    %c0_i32 = arith.constant 0 : i32
    %c0_i32_0 = arith.constant 0 : i32
    %c0_i32_1 = arith.constant 0 : i32
    return %c0_i32, %c0_i32_0 : i32, i32
  }
  func.func @transform_3(%arg0: i32, %arg1: i32) -> (i32, i32, i32) {
    %c0_i32 = arith.constant 0 : i32
    %c0_i32_0 = arith.constant 0 : i32
    return %arg0, %c0_i32, %arg1 : i32, i32, i32
  }
}

</mosaic_0001>

<llo_original>
// kernel: tpu_custom_call.1
$region0: #{tpu_custom_call.1}
  #allocation0 [shape = 'u32[]', space=smem, size = 0x4, offset = 0x4, fixed_abs, tag = 'smem constant byte address 0x4 - core index']
  #allocation1 [shape = 'u32[144,128]{1,0:T(1,128)}', space=vmem, size = 0x12000, scoped, tag = 'internal scratch']
  %s0 = inlined_call_operand.vmem [shape: f32[2,36,64], index: 0, kind: input, shape index: {}]
  %s1 = inlined_call_operand.vmem [shape: f32[32,36], index: 1, kind: input, shape index: {}]
  %s2 = inlined_call_operand.vmem [shape: f32[32,1], index: 2, kind: input, shape index: {}]
  %s3 = inlined_call_operand.hbm [shape: f32[2,32,64], index: 3, kind: output, shape index: {}]
  %s4 = sld [smem:[#allocation0]]
  $region45: #{tpu_custom_call.1} parent=0
    _
  %s6 = ssub.s32 1, %s4
  %s7 = scalar_select 0, %s6, %s4
  $region1: #{tpu_custom_call.1} parent=0
    #allocation2 [shape = 'u8[32768]{0}', space=vmem, size = 0x8000, scoped, tag = 'output window, operand 0']
    #allocation3 [shape = 's32[2]{0}', space=sflag, size = 0x8, scoped, tag = 'scoped memory for tpu_custom_call.1']
    %8 = vsyncpa [#allocation3], 0
    %s9 = scalar_lea.sflag [#allocation3], 1
    %10 = vsyncpa %s9, 0
    loop: start=0, step=1, limit=4
    $region2: #{tpu_custom_call.1} parent=1 // loop_pre_header
      _
    $region3: #{tpu_custom_call.1} parent=1 // loop_header
      %s12 = sphi 0, %s16
      %p13 = scmp.ge.s32.totalorder %s12, 4
      %s19 = sphi 0, %s31
      %s20 = sphi 0, %s27
      %s21 = sphi 0, %s19
      %s22 = sphi 0, %s20
      %s23 = sphi 0, %s21
      %s24 = sphi 0, %s22
      %s36 = sphi 0, %s38
      %s39 = sphi 0, %s36
      %s40 = sphi 0, %s39
      %s56 = sphi 0, %s40
      %s60 = sphi 0, %s60
      %s62 = sphi 0, %s60
      %s63 = sphi 0, %s62
      %s77 = sphi 0, %s63
      %s81 = sphi 0, %s81
      %s83 = sphi 0, %s81
      %s84 = sphi 0, %s83
      %s98 = sphi 0, %s84
      %s106 = sphi 0, %s108
      %s109 = sphi 0, %s106
      %s110 = sphi 0, %s109
      %s126 = sphi 0, %s110
    $region4: #{tpu_custom_call.1} parent=1 // loop_header_branch
      %15 = sbr.rel (%p13) target = $region8
    $region5: #{tpu_custom_call.1} parent=1 // loop_body
      %s17 = ssub.s32 %s12, 1
      %s18 = ssub.s32 %s12, 2
      %s25 = sadd.s32 1, %s20
      %p26 = scmp.ge.s32.totalorder %s25, 1
      %s27 = scalar_select %p26, 0, %s25
      %s28 = sadd.s32 1, %s19
      %s29 = scalar_select %p26, %s28, %s19
      %p30 = scmp.ge.s32.totalorder %s29, 2
      %s31 = scalar_select %p30, 0, %s29
      %s32 = ssub.s32 %s19, %s31
      %s33 = ssub.s32 %s20, %s27
      %s34 = sor.u32 %s32, %s33
      %p35 = scmp.eq.s32.totalorder %s34, 0
      %s37 = sadd.s32 %s36, 1
      %s38 = scalar_select %p35, %s36, %s37
      %p41 = pneg %p35
      %p42 = scmp.eq.s32.totalorder %s12, 1
      %p43 = por %p41, %p42
      %p44 = scmp.ne.s32.totalorder %s36, %s39
      %p45 = scmp.eq.s32.totalorder %s12, 0
      %p46 = por %p44, %p45
      %p47 = scmp.ne.s32.totalorder %s36, %s39
      %p48 = scmp.eq.s32.totalorder %s17, 1
      %p49 = por %p47, %p48
      %p50 = scmp.ne.s32.totalorder %s39, %s40
      %p51 = scmp.eq.s32.totalorder %s17, 0
      %p52 = por %p50, %p51
      %p53 = scmp.ne.s32.totalorder %s39, %s40
      %p54 = scmp.eq.s32.totalorder %s18, 1
      %p55 = por %p53, %p54
      %p57 = scmp.ne.s32.totalorder %s40, %s56
      %p58 = scmp.eq.s32.totalorder %s18, 0
      %p59 = por %p57, %p58
      %s61 = sadd.s32 %s60, 1
      %p64 = scmp.eq.s32.totalorder %s12, 1
      %p65 = scmp.ne.s32.totalorder %s60, %s62
      %p66 = scmp.eq.s32.totalorder %s12, 0
      %p67 = por %p65, %p66
      %p68 = scmp.ne.s32.totalorder %s60, %s62
      %p69 = scmp.eq.s32.totalorder %s17, 1
      %p70 = por %p68, %p69
      %p71 = scmp.ne.s32.totalorder %s62, %s63
      %p72 = scmp.eq.s32.totalorder %s17, 0
      %p73 = por %p71, %p72
      %p74 = scmp.ne.s32.totalorder %s62, %s63
      %p75 = scmp.eq.s32.totalorder %s18, 1
      %p76 = por %p74, %p75
      %p78 = scmp.ne.s32.totalorder %s63, %s77
      %p79 = scmp.eq.s32.totalorder %s18, 0
      %p80 = por %p78, %p79
      %s82 = sadd.s32 %s81, 1
      %p85 = scmp.eq.s32.totalorder %s12, 1
      %p86 = scmp.ne.s32.totalorder %s81, %s83
      %p87 = scmp.eq.s32.totalorder %s12, 0
      %p88 = por %p86, %p87
      %p89 = scmp.ne.s32.totalorder %s81, %s83
      %p90 = scmp.eq.s32.totalorder %s17, 1
      %p91 = por %p89, %p90
      %p92 = scmp.ne.s32.totalorder %s83, %s84
      %p93 = scmp.eq.s32.totalorder %s17, 0
      %p94 = por %p92, %p93
      %p95 = scmp.ne.s32.totalorder %s83, %s84
      %p96 = scmp.eq.s32.totalorder %s18, 1
      %p97 = por %p95, %p96
      %p99 = scmp.ne.s32.totalorder %s84, %s98
      %p100 = scmp.eq.s32.totalorder %s18, 0
      %p101 = por %p99, %p100
      %s102 = ssub.s32 %s19, %s31
      %s103 = ssub.s32 %s20, %s27
      %s104 = sor.u32 %s102, %s103
      %p105 = scmp.eq.s32.totalorder %s104, 0
      %s107 = sadd.s32 %s106, 1
      %s108 = scalar_select %p105, %s106, %s107
      %p111 = pneg %p105
      %p112 = scmp.eq.s32.totalorder %s12, 1
      %p113 = por %p111, %p112
      %p114 = scmp.ne.s32.totalorder %s106, %s109
      %p115 = scmp.eq.s32.totalorder %s12, 0
      %p116 = por %p114, %p115
      %p117 = scmp.ne.s32.totalorder %s106, %s109
      %p118 = scmp.eq.s32.totalorder %s17, 1
      %p119 = por %p117, %p118
      %p120 = scmp.ne.s32.totalorder %s109, %s110
      %p121 = scmp.eq.s32.totalorder %s17, 0
      %p122 = por %p120, %p121
      %p123 = scmp.ne.s32.totalorder %s109, %s110
      %p124 = scmp.eq.s32.totalorder %s18, 1
      %p125 = por %p123, %p124
      %p127 = scmp.ne.s32.totalorder %s110, %s126
      %p128 = scmp.eq.s32.totalorder %s18, 0
      %p129 = por %p127, %p128
      %p130 = scmp.le.s32.totalorder 1, %s12
      %p131 = scmp.lt.s32.totalorder %s12, 3
      %p132 = pnand %p130, %p131
      %p133 = pneg %p132
      // Predicated region
      $region9: #{tpu_custom_call.1} parent=5 // pred_check
        _
      $region10: #{tpu_custom_call.1} parent=5 // pred_check_branch
        %135 = sbr.rel (%p132) target = $region12
      $region11: #{tpu_custom_call.1} parent=5 // pred_region
        %s136 = ssub.s32 %s12, 1
        // Predicated region
        $region13: #{tpu_custom_call.1} parent=11 // pred_check
          %p137 = pneg %p73
        $region14: #{tpu_custom_call.1} parent=11 // pred_check_branch
          %139 = sbr.rel (%p137) target = $region16
        $region15: #{tpu_custom_call.1} parent=11 // pred_region
          _
        $region16: #{tpu_custom_call.1} parent=11 // pred_fallthru
          _
        // Predicated region
        $region17: #{tpu_custom_call.1} parent=11 // pred_check
          %p140 = pneg %p94
        $region18: #{tpu_custom_call.1} parent=11 // pred_check_branch
          %142 = sbr.rel (%p140) target = $region20
        $region19: #{tpu_custom_call.1} parent=11 // pred_region
          _
        $region20: #{tpu_custom_call.1} parent=11 // pred_fallthru
          _
      $region12: #{tpu_custom_call.1} parent=5 // pred_fallthru
        _
      %p143 = scmp.lt.s32.totalorder %s12, 2
      // Predicated region
      $region21: #{tpu_custom_call.1} parent=5 // pred_check
        %p144 = pneg %p143
      $region22: #{tpu_custom_call.1} parent=5 // pred_check_branch
        %146 = sbr.rel (%p144) target = $region24
      $region23: #{tpu_custom_call.1} parent=5 // pred_region
        // Predicated region
        $region25: #{tpu_custom_call.1} parent=23 // pred_check
          %p147 = pneg %p46
        $region26: #{tpu_custom_call.1} parent=23 // pred_check_branch
          %149 = sbr.rel (%p147) target = $region28
        $region27: #{tpu_custom_call.1} parent=23 // pred_region
          %p150 = scmp.lt.s32.totalorder %s19, 1
          %s151 = scalar_select %p150, %s19, 1
          %p152 = scmp.lt.s32.totalorder %s20, 0
          %s153 = scalar_select %p152, %s20, 0
          %s154 = smul.addr %s151, 5
          %s155 = sadd.s32 %s153, %s154
          %s156 = smul.addr %s155, 8
          %s157 = scalar_lea.vmem %s0, %s156
        $region28: #{tpu_custom_call.1} parent=23 // pred_fallthru
          _
      $region24: #{tpu_custom_call.1} parent=5 // pred_fallthru
        _
      %p158 = scmp.le.s32.totalorder 1, %s12
      %p159 = scmp.lt.s32.totalorder %s12, 3
      %p160 = pnand %p158, %p159
      %p161 = pneg %p160
      // Predicated region
      $region29: #{tpu_custom_call.1} parent=5 // pred_check
        _
      $region30: #{tpu_custom_call.1} parent=5 // pred_check_branch
        %163 = sbr.rel (%p160) target = $region32
      $region31: #{tpu_custom_call.1} parent=5 // pred_region
        %s164 = ssub.s32 %s12, 1
        %p165 = scmp.lt.s32.totalorder %s21, 1
        %s166 = scalar_select %p165, %s21, 1
        %p167 = scmp.lt.s32.totalorder %s22, 0
        %s168 = scalar_select %p167, %s22, 0
        %s169 = smul.addr %s166, 5
        %s170 = sadd.s32 %s168, %s169
        %s171 = smul.addr %s170, 8
        %s172 = scalar_lea.vmem %s0, %s171
        %p173 = pneg %p52
        %p174 = pneg %p49
        %p175 = pneg %p73
        %p176 = pneg %p70
        %p177 = pneg %p94
        %p178 = pneg %p91
        %p179 = pneg %p122
        %p180 = pneg %p119
        %s181 = sand.u32 %s109, 1
        %s182 = scalar_lea.sflag [#allocation3], %s181
        %s183 = sand.u32 %s109, 1
        %s184 = smul.addr %s183, 32
        %s185 = scalar_lea.vmem [#allocation2], %s184
        %p186 = scmp.lt.s32.totalorder %s21, 1
        %s187 = scalar_select %p186, %s21, 1
        %p188 = scmp.lt.s32.totalorder %s22, 0
        %s189 = scalar_select %p188, %s22, 0
        %s190 = smul.addr %s187, 5
        %s191 = sadd.s32 %s189, %s190
        %s192 = smul.addr %s191, 8
        %s193 = scalar_lea.vmem %s0, %s192
        %v194 = vld [vmem:[%s193] sm:$0xff]
        %v195 = vld [vmem:[%s193 + $0x8] sm:$0xff]
        %v196 = vld [vmem:[%s193 + $0x10] sm:$0xff]
        %v197 = vld [vmem:[%s193 + $0x18] sm:$0xff]
        %v198 = vld [vmem:[%s193 + $0x20] sm:$0xf]
        %v199 = vld [vmem:[%s1] sm:$0xff]
        %v200 = vld [vmem:[%s1 + $0x8] sm:$0xff]
        %v201 = vld [vmem:[%s1 + $0x10] sm:$0xff]
        %v202 = vld [vmem:[%s1 + $0x18] sm:$0xff]
        %v203 = vld [vmem:[%s2] sm:$0xff]
        %v204 = vld [vmem:[%s2 + $0x8] sm:$0xff]
        %v205 = vld [vmem:[%s2 + $0x10] sm:$0xff]
        %v206 = vld [vmem:[%s2 + $0x18] sm:$0xff]
        %208 = vset.pattern.permute.xlu0 0
        %209 = vperm.xlu0 %208, %v203
        %v210 = vpop.permute.xlu0 %209
        %213 = vset.pattern.permute.xlu0 0
        %214 = vperm.xlu0 %213, %v204
        %v215 = vpop.permute.xlu0 %214
        %218 = vset.pattern.permute.xlu0 0
        %219 = vperm.xlu0 %218, %v205
        %v220 = vpop.permute.xlu0 %219
        %223 = vset.pattern.permute.xlu0 0
        %224 = vperm.xlu0 %223, %v206
        %v225 = vpop.permute.xlu0 %224
        %vm227 = vcmask 293888
        %v229 = vsel %vm227, %v199, 0
        %v232 = vsel %vm227, %v200, 0
        %v235 = vsel %vm227, %v201, 0
        %v238 = vsel %vm227, %v202, 0
        %vm240 = vcmask 1043456
        %v242 = vsel %vm240, %v198, 0
        %244 = vmatprep.subr.mxu0 0.0
        %245 = vmatpush1.msra.mxu0 %v194
        %246 = vmatprep.subr.mxu0 0.0
        %247 = vmatpush1.msra.mxu0 %v195
        %248 = vmatprep.subr.mxu0 0.0
        %249 = vmatpush1.msra.mxu0 %v196
        %250 = vmatprep.subr.mxu0 0.0
        %251 = vmatpush1.msra.mxu0 %v197
        %252 = vmatprep.subr.mxu0 0.0
        %253 = vmatpush1.msra.mxu0 %v242
        %254 = vmatprep.subr.mxu0 0.0
        %255 = vmatpush1.msra.mxu0 0.0
        %256 = vmatprep.subr.mxu0 0.0
        %257 = vmatpush1.msra.mxu0 0.0
        %258 = vmatprep.subr.mxu0 0.0
        %259 = vmatpush1.msra.mxu0 0.0
        %260 = vmatprep.subr.mxu0 0.0
        %261 = vmatpush1.msra.mxu0 0.0
        %262 = vmatprep.subr.mxu0 0.0
        %263 = vmatpush1.msra.mxu0 0.0
        %264 = vmatprep.subr.mxu0 0.0
        %265 = vmatpush1.msra.mxu0 0.0
        %266 = vmatprep.subr.mxu0 0.0
        %267 = vmatpush1.msra.mxu0 0.0
        %268 = vmatprep.subr.mxu0 0.0
        %269 = vmatpush1.msra.mxu0 0.0
        %270 = vmatprep.subr.mxu0 0.0
        %271 = vmatpush1.msra.mxu0 0.0
        %272 = vmatprep.subr.mxu0 0.0
        %273 = vmatpush1.msra.mxu0 0.0
        %274 = vmatprep.subr.mxu0 0.0
        %275 = vmatpush1.msra.mxu0 0.0
        %276 = vmatprep.subr.mxu0 0.0
        %277 = vmatpush1.msra.mxu0 0.0
        %278 = vmatprep.subr.mxu0 0.0
        %279 = vmatpush1.msra.mxu0 0.0
        %280 = vmatprep.subr.mxu0 0.0
        %281 = vmatpush1.msra.mxu0 0.0
        %282 = vmatprep.subr.mxu0 0.0
        %283 = vmatpush1.msra.mxu0 0.0
        %284 = vmatprep.subr.mxu0 0.0
        %285 = vmatpush1.msra.mxu0 0.0
        %286 = vmatprep.subr.mxu0 0.0
        %287 = vmatpush1.msra.mxu0 0.0
        %288 = vmatprep.subr.mxu0 0.0
        %289 = vmatpush1.msra.mxu0 0.0
        %290 = vmatprep.subr.mxu0 0.0
        %291 = vmatpush1.msra.mxu0 0.0
        %292 = vmatprep.subr.mxu0 0.0
        %293 = vmatpush1.msra.mxu0 0.0
        %294 = vmatprep.subr.mxu0 0.0
        %295 = vmatpush1.msra.mxu0 0.0
        %296 = vmatprep.subr.mxu0 0.0
        %297 = vmatpush1.msra.mxu0 0.0
        %298 = vmatprep.subr.mxu0 0.0
        %299 = vmatpush1.msra.mxu0 0.0
        %300 = vmatprep.subr.mxu0 0.0
        %301 = vmatpush1.msra.mxu0 0.0
        %302 = vmatprep.subr.mxu0 0.0
        %303 = vmatpush1.msra.mxu0 0.0
        %304 = vmatprep.subr.mxu0 0.0
        %305 = vmatpush1.msra.mxu0 0.0
        %306 = vmatprep.subr.mxu0 0.0
        %307 = vmatpush1.msra.mxu0 0.0
        %308 = vmatprep.mubr.f32.mxu0 0.0
        %309 = vmatmul.mubr.f32.gmra.mrb[0].mxu0 %v229
        %v310 = vpop.f32.mrb[0].mxu0
        %v311 = vadd.f32 %v210, %v310
        %v312 = vpop.f32.mrb[0].mxu0
        %313 = vmatprep.mubr.f32.mxu0 0.0
        %314 = vmatmul.mubr.f32.gmra.mrb[0].mxu0 %v232
        %v315 = vpop.f32.mrb[0].mxu0
        %v316 = vadd.f32 %v215, %v315
        %v317 = vpop.f32.mrb[0].mxu0
        %318 = vmatprep.mubr.f32.mxu0 0.0
        %319 = vmatmul.mubr.f32.gmra.mrb[0].mxu0 %v235
        %v320 = vpop.f32.mrb[0].mxu0
        %v321 = vadd.f32 %v220, %v320
        %v322 = vpop.f32.mrb[0].mxu0
        %323 = vmatprep.mubr.f32.mxu0 0.0
        %324 = vmatmul.mubr.f32.gmra.mrb[0].mxu0 %v238
        %v325 = vpop.f32.mrb[0].mxu0
        %v326 = vadd.f32 %v225, %v325
        %v327 = vpop.f32.mrb[0].mxu0
        %328 = vdwg.mxu0
        %vm329 = vcmask 523264
        %330 = vst.msk [vmem:[%s185] sm:$0xff] %vm329, %v311
        %331 = vst.msk [vmem:[%s185 + $0x8] sm:$0xff] %vm329, %v316
        %332 = vst.msk [vmem:[%s185 + $0x10] sm:$0xff] %vm329, %v321
        %333 = vst.msk [vmem:[%s185 + $0x18] sm:$0xff] %vm329, %v326
        %s334 = sand.u32 %s109, 1
        %s335 = scalar_lea.sflag [#allocation3], %s334
        %s336 = sand.u32 %s109, 1
        %s337 = smul.addr %s336, 32
        %s338 = scalar_lea.vmem [#allocation2], %s337
        // Predicated region
        $region33: #{tpu_custom_call.1} parent=31 // pred_check
          %p339 = pneg %p119
        $region34: #{tpu_custom_call.1} parent=31 // pred_check_branch
          %341 = sbr.rel (%p339) target = $region36
        $region35: #{tpu_custom_call.1} parent=31 // pred_region
          %s343 = ssub.s32 512, 512
          %344 = vsyncadd %s335, %s343
          %s345 = smul.addr %s21, 4
          %s346 = sadd.s32 %s22, %s345
          %s347 = smul.addr %s346, 128
          %s348 = scalar_lea.hbm %s3, %s347
          %s349 = sshll.u32 %s338, 4
          %s350 = int_to_ptr.vmem [resolvable:$true] %s349
          %355 = dma.vmem_to_hbm [thread:$0]  %s350, 512, %s348, %s335, 128, 128, 8
        $region36: #{tpu_custom_call.1} parent=31 // pred_fallthru
          _
      $region32: #{tpu_custom_call.1} parent=5 // pred_fallthru
        _
      %p356 = scmp.le.s32.totalorder 2, %s12
      // Predicated region
      $region37: #{tpu_custom_call.1} parent=5 // pred_check
        %p357 = pneg %p356
      $region38: #{tpu_custom_call.1} parent=5 // pred_check_branch
        %359 = sbr.rel (%p357) target = $region40
      $region39: #{tpu_custom_call.1} parent=5 // pred_region
        %s360 = ssub.s32 %s12, 2
        // Predicated region
        $region41: #{tpu_custom_call.1} parent=39 // pred_check
          %p361 = pneg %p125
        $region42: #{tpu_custom_call.1} parent=39 // pred_check_branch
          %363 = sbr.rel (%p361) target = $region44
        $region43: #{tpu_custom_call.1} parent=39 // pred_region
          %s364 = sand.u32 %s110, 1
          %s365 = scalar_lea.sflag [#allocation3], %s364
          %s366 = sand.u32 %s110, 1
          %s367 = smul.addr %s366, 32
          %s368 = scalar_lea.vmem [#allocation2], %s367
          %369 = dma.done %s365, 512
        $region44: #{tpu_custom_call.1} parent=39 // pred_fallthru
          _
      $region40: #{tpu_custom_call.1} parent=5 // pred_fallthru
        _
    $region6: #{tpu_custom_call.1} parent=1 // loop_footer
      %s16 = sadd.s32 1, %s12
    $region7: #{tpu_custom_call.1} parent=1 // loop_footer_branch
      %11 = sbr.rel target = $region3
    $region8: #{tpu_custom_call.1} parent=1 // loop_exit
      _
    %370 = vsyncpa [#allocation3], 1
    %s371 = scalar_lea.sflag [#allocation3], 1
    %372 = vsyncpa %s371, 1

</llo_original>
